<compile_context>
chip_gen: v5e
topology: v5e:2x2
jax: 0.10.0
libtpu: 0.0.40
codegen_flags: <defaults>
</compile_context>

<pallas_src>
import numpy as np
import jax
import jax.numpy as jnp
from jax.experimental import pallas as pl
from jax.experimental.pallas import tpu as pltpu

VAL_OFFSET = 6
VAL_STAT_NP = np.array(
    [2 / 8, 2 / 7, 2 / 6, 2 / 5, 2 / 4, 2 / 3, 2 / 2,
     3 / 2, 4 / 2, 5 / 2, 6 / 2, 7 / 2, 8 / 2],
    dtype=np.float32,
)
_NUM_STATS = 5
_LANES = 128
_SUBLANES = 8


def _pad_table(w: jnp.ndarray) -> jnp.ndarray:
    """(V, D) float32 -> (V, 1, 128) lane-padded copy (zeros beyond D)."""
    v, d = w.shape
    out = jnp.zeros((v, 1, _LANES), jnp.float32)
    return out.at[:, 0, :d].set(w)


class State2Jax:
    """JAX/Pallas port of PyTorch State2: replaces tokens with embeddings and
    applies opponent stat boosts.  Dict recursion is host-side glue; all embedding
    gathers + the boost multiply run in one fused Pallas kernel, and the
    slab->pytree unpacking runs in one jitted XLA program."""

    type_fields = {"pokemontype1", "pokemontype2", "movetype"}
    move_fields = {"moveid"}
    condition_fields = {"condition"}
    move_category_fields = {"category"}
    opponent_field = {"opponent"}

    _stat_keys = ["atk", "def", "spa", "spd", "spe"]
    _boost_keys = ["oppatk", "oppdef", "oppspa", "oppspd", "oppspe"]

    def __init__(self, settings, key):
        k0, k1, k2, k3 = jax.random.split(key, 4)
        names = ["type", "move", "condition", "move_category"]
        keys = [k0, k1, k2, k3]
        self.tables = []       # logical (V, D) weights (nn.Embedding ~ N(0,1))
        self.dims = []
        for name, k in zip(names, keys):
            v = settings[name]["dict_size"]
            d = settings[name]["embed_dim"]
            w = jax.random.normal(k, (v, d), dtype=jnp.float32)
            self.tables.append(w)
            self.dims.append(d)
        # ONE concatenated, lane-padded table (V_total, 1, 128) + per-table offsets.
        padded = [_pad_table(w) for w in self.tables]
        offs, acc = [], 0
        for w in self.tables:
            offs.append(acc)
            acc += w.shape[0]
        self.table_offsets = offs
        self.table_cat = jnp.concatenate(padded, axis=0)  # (V_total, 1, 128)

        self._kernel_cache = {}
        self._unpack_cache = {}
        self._buffered_ok = True   # flips off if pl.Buffered(1) is rejected

    # ------------------------------------------------------------------ #
    # fused kernel factory (cached per padded problem size only)
    # ------------------------------------------------------------------ #
    def _get_kernel_fn(self, n_lookup_pad, n_jobs_pad, buffered):
        cache_key = (n_lookup_pad, n_jobs_pad, buffered)
        fn = self._kernel_cache.get(cache_key)
        if fn is not None:
            return fn

        n_rows = n_lookup_pad + n_jobs_pad
        n_groups = n_lookup_pad // _SUBLANES

        def kernel(ids_ref, table_ref, stats_ref, mult_ref, out_ref):
            # --- embedding gathers: ids on the scalar path (SMEM); rows gathered
            #     from the single concatenated VMEM table; stores grouped into
            #     full (8,128) unmasked tiles. -------------------------------
            for g in range(n_groups):                        # static unroll
                rows = [table_ref[ids_ref[g * _SUBLANES + s]]        # (1,128)
                        for s in range(_SUBLANES)]
                out_ref[pl.ds(g * _SUBLANES, _SUBLANES), :] = (
                    jnp.concatenate(rows, axis=0))
            # --- boost epilogue: multiplier precomputed on host; one vmul + one
            #     full-tile store. ------------------------------------------
            out_ref[pl.ds(n_lookup_pad, n_jobs_pad), :] = (
                stats_ref[...] * mult_ref[...])

        map3 = lambda i, ids: (0, 0, 0)
        map2 = lambda i, ids: (0, 0)

        def in_spec(shape, imap):
            if buffered:
                # grid=(1,): nothing to pipeline -> single-buffer the inputs.
                return pl.BlockSpec(shape, imap, pipeline_mode=pl.Buffered(1))
            return pl.BlockSpec(shape, imap)

        call = pl.pallas_call(
            kernel,
            out_shape=jax.ShapeDtypeStruct((n_rows, _LANES), jnp.float32),
            grid_spec=pltpu.PrefetchScalarGridSpec(
                num_scalar_prefetch=1,
                grid=(1,),
                in_specs=[in_spec(self.table_cat.shape, map3),
                          in_spec((n_jobs_pad, _LANES), map2),
                          in_spec((n_jobs_pad, _LANES), map2)],
                out_specs=pl.BlockSpec((n_rows, _LANES), map2),
            ),
            compiler_params=pltpu.CompilerParams(
                dimension_semantics=("arbitrary",)),
        )
        fn = jax.jit(call)
        self._kernel_cache[cache_key] = fn
        return fn

    # ------------------------------------------------------------------ #
    # fused slab -> per-field unpack (one jitted dispatch, cached per structure)
    # ------------------------------------------------------------------ #
    def _get_unpack_fn(self, patch_key, n_jobs, n_lookup_pad):
        cache_key = (patch_key, n_jobs, n_lookup_pad)
        fn = self._unpack_cache.get(cache_key)
        if fn is not None:
            return fn

        def unpack(slab):
            fields = tuple(slab[r0:r0 + n, :dim] for (r0, n, dim) in patch_key)
            stats = tuple(slab[n_lookup_pad + j, i].reshape(1, 1)
                          for j in range(n_jobs) for i in range(_NUM_STATS))
            return fields, stats

        fn = jax.jit(unpack)
        self._unpack_cache[cache_key] = fn
        return fn

    # ------------------------------------------------------------------ #
    # host-side glue: walk dict, collect ids, scatter kernel results back
    # ------------------------------------------------------------------ #
    def _table_for(self, key):
        if key in self.type_fields:
            return 0
        if key in self.move_fields:
            return 1
        if key in self.condition_fields:
            return 2
        if key in self.move_category_fields:
            return 3
        return None

    def _collect(self, x, ids, patches, boost_jobs):
        out = {}
        for key, value in x.items():
            if key in self.opponent_field:
                sub = self._collect(value, ids, patches, boost_jobs)
                stat_vals = [float(np.asarray(value["active"]["stats"][a]).ravel()[0])
                             for a in self._stat_keys]
                mult_vals = []
                for b in self._boost_keys:
                    # .long()-style truncation toward zero, then +VAL_OFFSET;
                    # clamp to [0,12] (nn.Embedding-style OOB would error; clamp
                    # keeps things memory-safe and matches all valid inputs).
                    bi = int(np.asarray(value["boosts"][b]).ravel()[0]) + VAL_OFFSET
                    bi = int(np.clip(bi, 0, len(VAL_STAT_NP) - 1))
                    mult_vals.append(float(VAL_STAT_NP[bi]))
                boost_jobs.append((sub["active"]["stats"], stat_vals, mult_vals))
                out[key] = sub
            elif isinstance(value, dict):
                out[key] = self._collect(value, ids, patches, boost_jobs)
            elif isinstance(value, np.ndarray):
                if value.dtype == np.bool_:
                    value = value.astype(np.uint8)
                t = self._table_for(key)
                if t is not None:
                    # clamp ids then shift by the table's row offset in the
                    # concatenated table.
                    v_ids = (np.clip(np.asarray(value).astype(np.int64).ravel(),
                                     0, self.tables[t].shape[0] - 1)
                             + self.table_offsets[t])
                    r0 = len(ids)
                    ids.extend(int(i) for i in v_ids)
                    patches.append((out, key, self.dims[t], r0, len(v_ids)))
                    out[key] = None  # filled from the kernel output slab
                else:
                    out[key] = jnp.asarray(value, jnp.float32)[:, None]
            else:
                raise ValueError(
                    "Every value in state dict must contain either integer or "
                    "dict. Found: {}".format(value))
        return out

    def __call__(self, x):
        ids, patches, boost_jobs = [], [], []
        out = self._collect(x, ids, patches, boost_jobs)
        n_lookup = len(ids)
        n_jobs = len(boost_jobs)
        if n_lookup + n_jobs == 0:
            return out

        # pad both segments to sublane multiples: unmasked tile stores + fewer
        # distinct cache keys across dict structures.
        n_lookup_pad = _SUBLANES * (-(-n_lookup // _SUBLANES))
        n_jobs_pad = _SUBLANES * max(1, -(-n_jobs // _SUBLANES))

        ids_padded = ids + [0] * (n_lookup_pad - n_lookup)
        if not ids_padded:                 # degenerate: no token fields at all
            ids_padded = [0]
        ids_arr = jnp.asarray(np.asarray(ids_padded, dtype=np.int32))

        stats_np = np.zeros((n_jobs_pad, _LANES), dtype=np.float32)
        mult_np = np.ones((n_jobs_pad, _LANES), dtype=np.float32)
        for j, (_, svals, mvals) in enumerate(boost_jobs):
            stats_np[j, :_NUM_STATS] = svals
            mult_np[j, :_NUM_STATS] = mvals
        stats_arr = jnp.asarray(stats_np)
        mult_arr = jnp.asarray(mult_np)

        slab = None
        if self._buffered_ok:
            try:
                fn = self._get_kernel_fn(n_lookup_pad, n_jobs_pad, buffered=True)
                slab = fn(ids_arr, self.table_cat, stats_arr, mult_arr)
            except Exception:
                self._buffered_ok = False  # jax version rejects Buffered(1)
        if slab is None:
            fn = self._get_kernel_fn(n_lookup_pad, n_jobs_pad, buffered=False)
            slab = fn(ids_arr, self.table_cat, stats_arr, mult_arr)

        # single jitted unpack: slab -> per-field arrays + per-job stat scalars.
        patch_key = tuple((r0, n, dim) for (_, _, dim, r0, n) in patches)
        unpack_fn = self._get_unpack_fn(patch_key, n_jobs, n_lookup_pad)
        fields, stat_scalars = unpack_fn(slab)

        for (d, key, _dim, _r0, _n), arr in zip(patches, fields):
            d[key] = arr
        si = 0
        for stats_dict, _svals, _mvals in boost_jobs:
            for a in self._stat_keys:
                stats_dict[a] = stat_scalars[si]
                si += 1
        return out


# ---------------------------------------------------------------------------
# Example state construction + run
# ---------------------------------------------------------------------------
def make_pokemon(rng: np.random.RandomState, settings):
    return {
        "pokemontype1": rng.randint(0, settings["type"]["dict_size"], size=1),
        "pokemontype2": rng.randint(0, settings["type"]["dict_size"], size=1),
        "condition": rng.randint(0, settings["condition"]["dict_size"], size=1),
        "hp": rng.rand(1).astype(np.float32),
        "trapped": np.array([False]),  # exercises the bool -> uint8 path
        "stats": {
            "atk": rng.rand(1).astype(np.float32) * 200.0,
            "def": rng.rand(1).astype(np.float32) * 200.0,
            "spa": rng.rand(1).astype(np.float32) * 200.0,
            "spd": rng.rand(1).astype(np.float32) * 200.0,
            "spe": rng.rand(1).astype(np.float32) * 200.0,
        },
        "moves": {
            "moveid": rng.randint(0, settings["move"]["dict_size"], size=4),
            "movetype": rng.randint(0, settings["type"]["dict_size"], size=4),
            "category": rng.randint(
                0, settings["move_category"]["dict_size"], size=4),
        },
    }


if __name__ == "__main__":
    settings = {
        "type": {"dict_size": 19, "embed_dim": 8},
        "move": {"dict_size": 64, "embed_dim": 16},
        "condition": {"dict_size": 8, "embed_dim": 8},
        "move_category": {"dict_size": 4, "embed_dim": 4},
    }

    model = State2Jax(settings, jax.random.PRNGKey(0))

    rng = np.random.RandomState(0)
    state = {
        "active": make_pokemon(rng, settings),
        "opponent": {
            "active": make_pokemon(rng, settings),
            "boosts": {
                "oppatk": np.array([2.0], dtype=np.float32),
                "oppdef": np.array([-1.0], dtype=np.float32),
                "oppspa": np.array([0.0], dtype=np.float32),
                "oppspd": np.array([1.0], dtype=np.float32),
                "oppspe": np.array([-2.0], dtype=np.float32),
            },
        },
    }

    out = model(state)
    out = jax.block_until_ready(out)

    # ---- sanity checks against pure-JAX reference --------------------------
    ref_moves = model.tables[1][jnp.asarray(
        state["active"]["moves"]["moveid"], jnp.int32)]
    assert out["active"]["moves"]["moveid"].shape == (4, 16)
    assert np.allclose(np.asarray(out["active"]["moves"]["moveid"]),
                       np.asarray(ref_moves), atol=1e-5)

    ref_type1 = model.tables[0][int(state["opponent"]["active"]["pokemontype1"][0])]
    assert np.allclose(
        np.asarray(out["opponent"]["active"]["pokemontype1"]).ravel(),
        np.asarray(ref_type1), atol=1e-5)

    ref_atk = (state["opponent"]["active"]["stats"]["atk"][0]
               * VAL_STAT_NP[VAL_OFFSET + 2])
    assert np.allclose(
        np.asarray(out["opponent"]["active"]["stats"]["atk"]).ravel()[0],
        ref_atk, rtol=1e-5)

    ref_def = (state["opponent"]["active"]["stats"]["def"][0]
               * VAL_STAT_NP[VAL_OFFSET - 1])
    assert np.allclose(
        np.asarray(out["opponent"]["active"]["stats"]["def"]).ravel()[0],
        ref_def, rtol=1e-5)

    # glue fields keep their values / shapes
    assert out["active"]["hp"].shape == (1, 1)
    assert np.allclose(np.asarray(out["active"]["hp"]).ravel()[0],
                       state["active"]["hp"][0], rtol=1e-6)
    assert np.asarray(out["active"]["trapped"]).ravel()[0] == 0.0

    print("KERNEL_OK")
</pallas_src>

<mosaic_0001>
module attributes {stable_mosaic.version = 11 : i64} {
  func.func @kernel(%arg0: i32, %arg1: memref<32xi32, #tpu.memory_space<smem>>, %arg2: memref<95x1x128xf32, #tpu.memory_space<vmem>>, %arg3: memref<8x128xf32, #tpu.memory_space<vmem>>, %arg4: memref<8x128xf32, #tpu.memory_space<vmem>>, %arg5: memref<40x128xf32, #tpu.memory_space<vmem>>) attributes {dimension_semantics = [#tpu.dimension_semantics<arbitrary>], iteration_bounds = array<i64: 1>, scalar_prefetch = 1 : i64, scratch_operands = 0 : i64, tpu.core_type = #tpu.core_type<tc>, window_params = [{pipeline_mode = #tpu.pipeline_mode<synchronous>, transform_indices = @transform_0, window_bounds = array<i64: 95, 1, 128>}, {pipeline_mode = #tpu.pipeline_mode<synchronous>, transform_indices = @transform_1, window_bounds = array<i64: 8, 128>}, {pipeline_mode = #tpu.pipeline_mode<synchronous>, transform_indices = @transform_2, window_bounds = array<i64: 8, 128>}, {pipeline_mode = #tpu.pipeline_mode<synchronous>, transform_indices = @transform_3, window_bounds = array<i64: 40, 128>}]} {
    %c0 = arith.constant 0 : index
    %0 = memref.load %arg1[%c0] : memref<32xi32, #tpu.memory_space<smem>>
    %1 = arith.index_cast %0 : i32 to index
    %c0_0 = arith.constant 0 : index
    %c0_1 = arith.constant 0 : index
    %2 = vector.load %arg2[%1, %c0_0, %c0_1] : memref<95x1x128xf32, #tpu.memory_space<vmem>>, vector<1x1x128xf32>
    %3 = vector.shape_cast %2 : vector<1x1x128xf32> to vector<1x128xf32>
    %c1 = arith.constant 1 : index
    %4 = memref.load %arg1[%c1] : memref<32xi32, #tpu.memory_space<smem>>
    %5 = arith.index_cast %4 : i32 to index
    %c0_2 = arith.constant 0 : index
    %c0_3 = arith.constant 0 : index
    %6 = vector.load %arg2[%5, %c0_2, %c0_3] : memref<95x1x128xf32, #tpu.memory_space<vmem>>, vector<1x1x128xf32>
    %7 = vector.shape_cast %6 : vector<1x1x128xf32> to vector<1x128xf32>
    %c2 = arith.constant 2 : index
    %8 = memref.load %arg1[%c2] : memref<32xi32, #tpu.memory_space<smem>>
    %9 = arith.index_cast %8 : i32 to index
    %c0_4 = arith.constant 0 : index
    %c0_5 = arith.constant 0 : index
    %10 = vector.load %arg2[%9, %c0_4, %c0_5] : memref<95x1x128xf32, #tpu.memory_space<vmem>>, vector<1x1x128xf32>
    %11 = vector.shape_cast %10 : vector<1x1x128xf32> to vector<1x128xf32>
    %c3 = arith.constant 3 : index
    %12 = memref.load %arg1[%c3] : memref<32xi32, #tpu.memory_space<smem>>
    %13 = arith.index_cast %12 : i32 to index
    %c0_6 = arith.constant 0 : index
    %c0_7 = arith.constant 0 : index
    %14 = vector.load %arg2[%13, %c0_6, %c0_7] : memref<95x1x128xf32, #tpu.memory_space<vmem>>, vector<1x1x128xf32>
    %15 = vector.shape_cast %14 : vector<1x1x128xf32> to vector<1x128xf32>
    %c4 = arith.constant 4 : index
    %16 = memref.load %arg1[%c4] : memref<32xi32, #tpu.memory_space<smem>>
    %17 = arith.index_cast %16 : i32 to index
    %c0_8 = arith.constant 0 : index
    %c0_9 = arith.constant 0 : index
    %18 = vector.load %arg2[%17, %c0_8, %c0_9] : memref<95x1x128xf32, #tpu.memory_space<vmem>>, vector<1x1x128xf32>
    %19 = vector.shape_cast %18 : vector<1x1x128xf32> to vector<1x128xf32>
    %c5 = arith.constant 5 : index
    %20 = memref.load %arg1[%c5] : memref<32xi32, #tpu.memory_space<smem>>
    %21 = arith.index_cast %20 : i32 to index
    %c0_10 = arith.constant 0 : index
    %c0_11 = arith.constant 0 : index
    %22 = vector.load %arg2[%21, %c0_10, %c0_11] : memref<95x1x128xf32, #tpu.memory_space<vmem>>, vector<1x1x128xf32>
    %23 = vector.shape_cast %22 : vector<1x1x128xf32> to vector<1x128xf32>
    %c6 = arith.constant 6 : index
    %24 = memref.load %arg1[%c6] : memref<32xi32, #tpu.memory_space<smem>>
    %25 = arith.index_cast %24 : i32 to index
    %c0_12 = arith.constant 0 : index
    %c0_13 = arith.constant 0 : index
    %26 = vector.load %arg2[%25, %c0_12, %c0_13] : memref<95x1x128xf32, #tpu.memory_space<vmem>>, vector<1x1x128xf32>
    %27 = vector.shape_cast %26 : vector<1x1x128xf32> to vector<1x128xf32>
    %c7 = arith.constant 7 : index
    %28 = memref.load %arg1[%c7] : memref<32xi32, #tpu.memory_space<smem>>
    %29 = arith.index_cast %28 : i32 to index
    %c0_14 = arith.constant 0 : index
    %c0_15 = arith.constant 0 : index
    %30 = vector.load %arg2[%29, %c0_14, %c0_15] : memref<95x1x128xf32, #tpu.memory_space<vmem>>, vector<1x1x128xf32>
    %31 = vector.shape_cast %30 : vector<1x1x128xf32> to vector<1x128xf32>
    %32 = tpu.concatenate %3, %7, %11, %15, %19, %23, %27, %31 in 0 : vector<1x128xf32>, vector<1x128xf32>, vector<1x128xf32>, vector<1x128xf32>, vector<1x128xf32>, vector<1x128xf32>, vector<1x128xf32>, vector<1x128xf32> -> vector<8x128xf32>
    %c0_16 = arith.constant 0 : index
    %c0_17 = arith.constant 0 : index
    %33 = vector.load %arg5[%c0_16, %c0_17] : memref<40x128xf32, #tpu.memory_space<vmem>>, vector<8x128xf32>
    tpu.vector_store %arg5[%c0_16, %c0_17], %32 {strides = array<i32>} : memref<40x128xf32, #tpu.memory_space<vmem>>, vector<8x128xf32>,
    %c8 = arith.constant 8 : index
    %34 = memref.load %arg1[%c8] : memref<32xi32, #tpu.memory_space<smem>>
    %35 = arith.index_cast %34 : i32 to index
    %c0_18 = arith.constant 0 : index
    %c0_19 = arith.constant 0 : index
    %36 = vector.load %arg2[%35, %c0_18, %c0_19] : memref<95x1x128xf32, #tpu.memory_space<vmem>>, vector<1x1x128xf32>
    %37 = vector.shape_cast %36 : vector<1x1x128xf32> to vector<1x128xf32>
    %c9 = arith.constant 9 : index
    %38 = memref.load %arg1[%c9] : memref<32xi32, #tpu.memory_space<smem>>
    %39 = arith.index_cast %38 : i32 to index
    %c0_20 = arith.constant 0 : index
    %c0_21 = arith.constant 0 : index
    %40 = vector.load %arg2[%39, %c0_20, %c0_21] : memref<95x1x128xf32, #tpu.memory_space<vmem>>, vector<1x1x128xf32>
    %41 = vector.shape_cast %40 : vector<1x1x128xf32> to vector<1x128xf32>
    %c10 = arith.constant 10 : index
    %42 = memref.load %arg1[%c10] : memref<32xi32, #tpu.memory_space<smem>>
    %43 = arith.index_cast %42 : i32 to index
    %c0_22 = arith.constant 0 : index
    %c0_23 = arith.constant 0 : index
    %44 = vector.load %arg2[%43, %c0_22, %c0_23] : memref<95x1x128xf32, #tpu.memory_space<vmem>>, vector<1x1x128xf32>
    %45 = vector.shape_cast %44 : vector<1x1x128xf32> to vector<1x128xf32>
    %c11 = arith.constant 11 : index
    %46 = memref.load %arg1[%c11] : memref<32xi32, #tpu.memory_space<smem>>
    %47 = arith.index_cast %46 : i32 to index
    %c0_24 = arith.constant 0 : index
    %c0_25 = arith.constant 0 : index
    %48 = vector.load %arg2[%47, %c0_24, %c0_25] : memref<95x1x128xf32, #tpu.memory_space<vmem>>, vector<1x1x128xf32>
    %49 = vector.shape_cast %48 : vector<1x1x128xf32> to vector<1x128xf32>
    %c12 = arith.constant 12 : index
    %50 = memref.load %arg1[%c12] : memref<32xi32, #tpu.memory_space<smem>>
    %51 = arith.index_cast %50 : i32 to index
    %c0_26 = arith.constant 0 : index
    %c0_27 = arith.constant 0 : index
    %52 = vector.load %arg2[%51, %c0_26, %c0_27] : memref<95x1x128xf32, #tpu.memory_space<vmem>>, vector<1x1x128xf32>
    %53 = vector.shape_cast %52 : vector<1x1x128xf32> to vector<1x128xf32>
    %c13 = arith.constant 13 : index
    %54 = memref.load %arg1[%c13] : memref<32xi32, #tpu.memory_space<smem>>
    %55 = arith.index_cast %54 : i32 to index
    %c0_28 = arith.constant 0 : index
    %c0_29 = arith.constant 0 : index
    %56 = vector.load %arg2[%55, %c0_28, %c0_29] : memref<95x1x128xf32, #tpu.memory_space<vmem>>, vector<1x1x128xf32>
    %57 = vector.shape_cast %56 : vector<1x1x128xf32> to vector<1x128xf32>
    %c14 = arith.constant 14 : index
    %58 = memref.load %arg1[%c14] : memref<32xi32, #tpu.memory_space<smem>>
    %59 = arith.index_cast %58 : i32 to index
    %c0_30 = arith.constant 0 : index
    %c0_31 = arith.constant 0 : index
    %60 = vector.load %arg2[%59, %c0_30, %c0_31] : memref<95x1x128xf32, #tpu.memory_space<vmem>>, vector<1x1x128xf32>
    %61 = vector.shape_cast %60 : vector<1x1x128xf32> to vector<1x128xf32>
    %c15 = arith.constant 15 : index
    %62 = memref.load %arg1[%c15] : memref<32xi32, #tpu.memory_space<smem>>
    %63 = arith.index_cast %62 : i32 to index
    %c0_32 = arith.constant 0 : index
    %c0_33 = arith.constant 0 : index
    %64 = vector.load %arg2[%63, %c0_32, %c0_33] : memref<95x1x128xf32, #tpu.memory_space<vmem>>, vector<1x1x128xf32>
    %65 = vector.shape_cast %64 : vector<1x1x128xf32> to vector<1x128xf32>
    %66 = tpu.concatenate %37, %41, %45, %49, %53, %57, %61, %65 in 0 : vector<1x128xf32>, vector<1x128xf32>, vector<1x128xf32>, vector<1x128xf32>, vector<1x128xf32>, vector<1x128xf32>, vector<1x128xf32>, vector<1x128xf32> -> vector<8x128xf32>
    %c8_34 = arith.constant 8 : index
    %c0_35 = arith.constant 0 : index
    %67 = vector.load %arg5[%c8_34, %c0_35] : memref<40x128xf32, #tpu.memory_space<vmem>>, vector<8x128xf32>
    tpu.vector_store %arg5[%c8_34, %c0_35], %66 {strides = array<i32>} : memref<40x128xf32, #tpu.memory_space<vmem>>, vector<8x128xf32>,
    %c16 = arith.constant 16 : index
    %68 = memref.load %arg1[%c16] : memref<32xi32, #tpu.memory_space<smem>>
    %69 = arith.index_cast %68 : i32 to index
    %c0_36 = arith.constant 0 : index
    %c0_37 = arith.constant 0 : index
    %70 = vector.load %arg2[%69, %c0_36, %c0_37] : memref<95x1x128xf32, #tpu.memory_space<vmem>>, vector<1x1x128xf32>
    %71 = vector.shape_cast %70 : vector<1x1x128xf32> to vector<1x128xf32>
    %c17 = arith.constant 17 : index
    %72 = memref.load %arg1[%c17] : memref<32xi32, #tpu.memory_space<smem>>
    %73 = arith.index_cast %72 : i32 to index
    %c0_38 = arith.constant 0 : index
    %c0_39 = arith.constant 0 : index
    %74 = vector.load %arg2[%73, %c0_38, %c0_39] : memref<95x1x128xf32, #tpu.memory_space<vmem>>, vector<1x1x128xf32>
    %75 = vector.shape_cast %74 : vector<1x1x128xf32> to vector<1x128xf32>
    %c18 = arith.constant 18 : index
    %76 = memref.load %arg1[%c18] : memref<32xi32, #tpu.memory_space<smem>>
    %77 = arith.index_cast %76 : i32 to index
    %c0_40 = arith.constant 0 : index
    %c0_41 = arith.constant 0 : index
    %78 = vector.load %arg2[%77, %c0_40, %c0_41] : memref<95x1x128xf32, #tpu.memory_space<vmem>>, vector<1x1x128xf32>
    %79 = vector.shape_cast %78 : vector<1x1x128xf32> to vector<1x128xf32>
    %c19 = arith.constant 19 : index
    %80 = memref.load %arg1[%c19] : memref<32xi32, #tpu.memory_space<smem>>
    %81 = arith.index_cast %80 : i32 to index
    %c0_42 = arith.constant 0 : index
    %c0_43 = arith.constant 0 : index
    %82 = vector.load %arg2[%81, %c0_42, %c0_43] : memref<95x1x128xf32, #tpu.memory_space<vmem>>, vector<1x1x128xf32>
    %83 = vector.shape_cast %82 : vector<1x1x128xf32> to vector<1x128xf32>
    %c20 = arith.constant 20 : index
    %84 = memref.load %arg1[%c20] : memref<32xi32, #tpu.memory_space<smem>>
    %85 = arith.index_cast %84 : i32 to index
    %c0_44 = arith.constant 0 : index
    %c0_45 = arith.constant 0 : index
    %86 = vector.load %arg2[%85, %c0_44, %c0_45] : memref<95x1x128xf32, #tpu.memory_space<vmem>>, vector<1x1x128xf32>
    %87 = vector.shape_cast %86 : vector<1x1x128xf32> to vector<1x128xf32>
    %c21 = arith.constant 21 : index
    %88 = memref.load %arg1[%c21] : memref<32xi32, #tpu.memory_space<smem>>
    %89 = arith.index_cast %88 : i32 to index
    %c0_46 = arith.constant 0 : index
    %c0_47 = arith.constant 0 : index
    %90 = vector.load %arg2[%89, %c0_46, %c0_47] : memref<95x1x128xf32, #tpu.memory_space<vmem>>, vector<1x1x128xf32>
    %91 = vector.shape_cast %90 : vector<1x1x128xf32> to vector<1x128xf32>
    %c22 = arith.constant 22 : index
    %92 = memref.load %arg1[%c22] : memref<32xi32, #tpu.memory_space<smem>>
    %93 = arith.index_cast %92 : i32 to index
    %c0_48 = arith.constant 0 : index
    %c0_49 = arith.constant 0 : index
    %94 = vector.load %arg2[%93, %c0_48, %c0_49] : memref<95x1x128xf32, #tpu.memory_space<vmem>>, vector<1x1x128xf32>
    %95 = vector.shape_cast %94 : vector<1x1x128xf32> to vector<1x128xf32>
    %c23 = arith.constant 23 : index
    %96 = memref.load %arg1[%c23] : memref<32xi32, #tpu.memory_space<smem>>
    %97 = arith.index_cast %96 : i32 to index
    %c0_50 = arith.constant 0 : index
    %c0_51 = arith.constant 0 : index
    %98 = vector.load %arg2[%97, %c0_50, %c0_51] : memref<95x1x128xf32, #tpu.memory_space<vmem>>, vector<1x1x128xf32>
    %99 = vector.shape_cast %98 : vector<1x1x128xf32> to vector<1x128xf32>
    %100 = tpu.concatenate %71, %75, %79, %83, %87, %91, %95, %99 in 0 : vector<1x128xf32>, vector<1x128xf32>, vector<1x128xf32>, vector<1x128xf32>, vector<1x128xf32>, vector<1x128xf32>, vector<1x128xf32>, vector<1x128xf32> -> vector<8x128xf32>
    %c16_52 = arith.constant 16 : index
    %c0_53 = arith.constant 0 : index
    %101 = vector.load %arg5[%c16_52, %c0_53] : memref<40x128xf32, #tpu.memory_space<vmem>>, vector<8x128xf32>
    tpu.vector_store %arg5[%c16_52, %c0_53], %100 {strides = array<i32>} : memref<40x128xf32, #tpu.memory_space<vmem>>, vector<8x128xf32>,
    %c24 = arith.constant 24 : index
    %102 = memref.load %arg1[%c24] : memref<32xi32, #tpu.memory_space<smem>>
    %103 = arith.index_cast %102 : i32 to index
    %c0_54 = arith.constant 0 : index
    %c0_55 = arith.constant 0 : index
    %104 = vector.load %arg2[%103, %c0_54, %c0_55] : memref<95x1x128xf32, #tpu.memory_space<vmem>>, vector<1x1x128xf32>
    %105 = vector.shape_cast %104 : vector<1x1x128xf32> to vector<1x128xf32>
    %c25 = arith.constant 25 : index
    %106 = memref.load %arg1[%c25] : memref<32xi32, #tpu.memory_space<smem>>
    %107 = arith.index_cast %106 : i32 to index
    %c0_56 = arith.constant 0 : index
    %c0_57 = arith.constant 0 : index
    %108 = vector.load %arg2[%107, %c0_56, %c0_57] : memref<95x1x128xf32, #tpu.memory_space<vmem>>, vector<1x1x128xf32>
    %109 = vector.shape_cast %108 : vector<1x1x128xf32> to vector<1x128xf32>
    %c26 = arith.constant 26 : index
    %110 = memref.load %arg1[%c26] : memref<32xi32, #tpu.memory_space<smem>>
    %111 = arith.index_cast %110 : i32 to index
    %c0_58 = arith.constant 0 : index
    %c0_59 = arith.constant 0 : index
    %112 = vector.load %arg2[%111, %c0_58, %c0_59] : memref<95x1x128xf32, #tpu.memory_space<vmem>>, vector<1x1x128xf32>
    %113 = vector.shape_cast %112 : vector<1x1x128xf32> to vector<1x128xf32>
    %c27 = arith.constant 27 : index
    %114 = memref.load %arg1[%c27] : memref<32xi32, #tpu.memory_space<smem>>
    %115 = arith.index_cast %114 : i32 to index
    %c0_60 = arith.constant 0 : index
    %c0_61 = arith.constant 0 : index
    %116 = vector.load %arg2[%115, %c0_60, %c0_61] : memref<95x1x128xf32, #tpu.memory_space<vmem>>, vector<1x1x128xf32>
    %117 = vector.shape_cast %116 : vector<1x1x128xf32> to vector<1x128xf32>
    %c28 = arith.constant 28 : index
    %118 = memref.load %arg1[%c28] : memref<32xi32, #tpu.memory_space<smem>>
    %119 = arith.index_cast %118 : i32 to index
    %c0_62 = arith.constant 0 : index
    %c0_63 = arith.constant 0 : index
    %120 = vector.load %arg2[%119, %c0_62, %c0_63] : memref<95x1x128xf32, #tpu.memory_space<vmem>>, vector<1x1x128xf32>
    %121 = vector.shape_cast %120 : vector<1x1x128xf32> to vector<1x128xf32>
    %c29 = arith.constant 29 : index
    %122 = memref.load %arg1[%c29] : memref<32xi32, #tpu.memory_space<smem>>
    %123 = arith.index_cast %122 : i32 to index
    %c0_64 = arith.constant 0 : index
    %c0_65 = arith.constant 0 : index
    %124 = vector.load %arg2[%123, %c0_64, %c0_65] : memref<95x1x128xf32, #tpu.memory_space<vmem>>, vector<1x1x128xf32>
    %125 = vector.shape_cast %124 : vector<1x1x128xf32> to vector<1x128xf32>
    %c30 = arith.constant 30 : index
    %126 = memref.load %arg1[%c30] : memref<32xi32, #tpu.memory_space<smem>>
    %127 = arith.index_cast %126 : i32 to index
    %c0_66 = arith.constant 0 : index
    %c0_67 = arith.constant 0 : index
    %128 = vector.load %arg2[%127, %c0_66, %c0_67] : memref<95x1x128xf32, #tpu.memory_space<vmem>>, vector<1x1x128xf32>
    %129 = vector.shape_cast %128 : vector<1x1x128xf32> to vector<1x128xf32>
    %c31 = arith.constant 31 : index
    %130 = memref.load %arg1[%c31] : memref<32xi32, #tpu.memory_space<smem>>
    %131 = arith.index_cast %130 : i32 to index
    %c0_68 = arith.constant 0 : index
    %c0_69 = arith.constant 0 : index
    %132 = vector.load %arg2[%131, %c0_68, %c0_69] : memref<95x1x128xf32, #tpu.memory_space<vmem>>, vector<1x1x128xf32>
    %133 = vector.shape_cast %132 : vector<1x1x128xf32> to vector<1x128xf32>
    %134 = tpu.concatenate %105, %109, %113, %117, %121, %125, %129, %133 in 0 : vector<1x128xf32>, vector<1x128xf32>, vector<1x128xf32>, vector<1x128xf32>, vector<1x128xf32>, vector<1x128xf32>, vector<1x128xf32>, vector<1x128xf32> -> vector<8x128xf32>
    %c24_70 = arith.constant 24 : index
    %c0_71 = arith.constant 0 : index
    %135 = vector.load %arg5[%c24_70, %c0_71] : memref<40x128xf32, #tpu.memory_space<vmem>>, vector<8x128xf32>
    tpu.vector_store %arg5[%c24_70, %c0_71], %134 {strides = array<i32>} : memref<40x128xf32, #tpu.memory_space<vmem>>, vector<8x128xf32>,
    %c0_72 = arith.constant 0 : index
    %c0_73 = arith.constant 0 : index
    %136 = vector.load %arg3[%c0_72, %c0_73] : memref<8x128xf32, #tpu.memory_space<vmem>>, vector<8x128xf32>
    %c0_74 = arith.constant 0 : index
    %c0_75 = arith.constant 0 : index
    %137 = vector.load %arg4[%c0_74, %c0_75] : memref<8x128xf32, #tpu.memory_space<vmem>>, vector<8x128xf32>
    %138 = arith.mulf %136, %137 : vector<8x128xf32>
    %c32 = arith.constant 32 : index
    %c0_76 = arith.constant 0 : index
    %139 = vector.load %arg5[%c32, %c0_76] : memref<40x128xf32, #tpu.memory_space<vmem>>, vector<8x128xf32>
    tpu.vector_store %arg5[%c32, %c0_76], %138 {strides = array<i32>} : memref<40x128xf32, #tpu.memory_space<vmem>>, vector<8x128xf32>,
    return
  }
  func.func @transform_0(%arg0: i32, %arg1: memref<32xi32, #tpu.memory_space<smem>>) -> (i32, i32, i32) {
    %c0_i32 = arith.constant 0 : i32
    %c0_i32_0 = arith.constant 0 : i32
    %c0_i32_1 = arith.constant 0 : i32
    %c0_i32_2 = arith.constant 0 : i32
    return %c0_i32, %c0_i32_0, %c0_i32_1 : i32, i32, i32
  }
  func.func @transform_1(%arg0: i32, %arg1: memref<32xi32, #tpu.memory_space<smem>>) -> (i32, i32) {
    %c0_i32 = arith.constant 0 : i32
    %c0_i32_0 = arith.constant 0 : i32
    %c0_i32_1 = arith.constant 0 : i32
    return %c0_i32, %c0_i32_0 : i32, i32
  }
  func.func @transform_2(%arg0: i32, %arg1: memref<32xi32, #tpu.memory_space<smem>>) -> (i32, i32) {
    %c0_i32 = arith.constant 0 : i32
    %c0_i32_0 = arith.constant 0 : i32
    %c0_i32_1 = arith.constant 0 : i32
    return %c0_i32, %c0_i32_0 : i32, i32
  }
  func.func @transform_3(%arg0: i32, %arg1: memref<32xi32, #tpu.memory_space<smem>>) -> (i32, i32) {
    %c0_i32 = arith.constant 0 : i32
    %c0_i32_0 = arith.constant 0 : i32
    %c0_i32_1 = arith.constant 0 : i32
    return %c0_i32, %c0_i32_0 : i32, i32
  }
}

module attributes {stable_mosaic.version = 11 : i64} {
  func.func @kernel(%arg0: i32, %arg1: memref<32xi32, #tpu.memory_space<smem>>, %arg2: memref<95x1x128xf32, #tpu.memory_space<vmem>>, %arg3: memref<8x128xf32, #tpu.memory_space<vmem>>, %arg4: memref<8x128xf32, #tpu.memory_space<vmem>>, %arg5: memref<40x128xf32, #tpu.memory_space<vmem>>) attributes {dimension_semantics = [#tpu.dimension_semantics<arbitrary>], iteration_bounds = array<i64: 1>, scalar_prefetch = 1 : i64, scratch_operands = 0 : i64, tpu.core_type = #tpu.core_type<tc>, window_params = [{pipeline_mode = #tpu.pipeline_mode<synchronous>, transform_indices = @transform_0, window_bounds = array<i64: 95, 1, 128>}, {pipeline_mode = #tpu.pipeline_mode<synchronous>, transform_indices = @transform_1, window_bounds = array<i64: 8, 128>}, {pipeline_mode = #tpu.pipeline_mode<synchronous>, transform_indices = @transform_2, window_bounds = array<i64: 8, 128>}, {pipeline_mode = #tpu.pipeline_mode<synchronous>, transform_indices = @transform_3, window_bounds = array<i64: 40, 128>}]} {
    %c0 = arith.constant 0 : index
    %0 = memref.load %arg1[%c0] : memref<32xi32, #tpu.memory_space<smem>>
    %1 = arith.index_cast %0 : i32 to index
    %c0_0 = arith.constant 0 : index
    %c0_1 = arith.constant 0 : index
    %2 = vector.load %arg2[%1, %c0_0, %c0_1] : memref<95x1x128xf32, #tpu.memory_space<vmem>>, vector<1x1x128xf32>
    %3 = vector.shape_cast %2 : vector<1x1x128xf32> to vector<1x128xf32>
    %c1 = arith.constant 1 : index
    %4 = memref.load %arg1[%c1] : memref<32xi32, #tpu.memory_space<smem>>
    %5 = arith.index_cast %4 : i32 to index
    %c0_2 = arith.constant 0 : index
    %c0_3 = arith.constant 0 : index
    %6 = vector.load %arg2[%5, %c0_2, %c0_3] : memref<95x1x128xf32, #tpu.memory_space<vmem>>, vector<1x1x128xf32>
    %7 = vector.shape_cast %6 : vector<1x1x128xf32> to vector<1x128xf32>
    %c2 = arith.constant 2 : index
    %8 = memref.load %arg1[%c2] : memref<32xi32, #tpu.memory_space<smem>>
    %9 = arith.index_cast %8 : i32 to index
    %c0_4 = arith.constant 0 : index
    %c0_5 = arith.constant 0 : index
    %10 = vector.load %arg2[%9, %c0_4, %c0_5] : memref<95x1x128xf32, #tpu.memory_space<vmem>>, vector<1x1x128xf32>
    %11 = vector.shape_cast %10 : vector<1x1x128xf32> to vector<1x128xf32>
    %c3 = arith.constant 3 : index
    %12 = memref.load %arg1[%c3] : memref<32xi32, #tpu.memory_space<smem>>
    %13 = arith.index_cast %12 : i32 to index
    %c0_6 = arith.constant 0 : index
    %c0_7 = arith.constant 0 : index
    %14 = vector.load %arg2[%13, %c0_6, %c0_7] : memref<95x1x128xf32, #tpu.memory_space<vmem>>, vector<1x1x128xf32>
    %15 = vector.shape_cast %14 : vector<1x1x128xf32> to vector<1x128xf32>
    %c4 = arith.constant 4 : index
    %16 = memref.load %arg1[%c4] : memref<32xi32, #tpu.memory_space<smem>>
    %17 = arith.index_cast %16 : i32 to index
    %c0_8 = arith.constant 0 : index
    %c0_9 = arith.constant 0 : index
    %18 = vector.load %arg2[%17, %c0_8, %c0_9] : memref<95x1x128xf32, #tpu.memory_space<vmem>>, vector<1x1x128xf32>
    %19 = vector.shape_cast %18 : vector<1x1x128xf32> to vector<1x128xf32>
    %c5 = arith.constant 5 : index
    %20 = memref.load %arg1[%c5] : memref<32xi32, #tpu.memory_space<smem>>
    %21 = arith.index_cast %20 : i32 to index
    %c0_10 = arith.constant 0 : index
    %c0_11 = arith.constant 0 : index
    %22 = vector.load %arg2[%21, %c0_10, %c0_11] : memref<95x1x128xf32, #tpu.memory_space<vmem>>, vector<1x1x128xf32>
    %23 = vector.shape_cast %22 : vector<1x1x128xf32> to vector<1x128xf32>
    %c6 = arith.constant 6 : index
    %24 = memref.load %arg1[%c6] : memref<32xi32, #tpu.memory_space<smem>>
    %25 = arith.index_cast %24 : i32 to index
    %c0_12 = arith.constant 0 : index
    %c0_13 = arith.constant 0 : index
    %26 = vector.load %arg2[%25, %c0_12, %c0_13] : memref<95x1x128xf32, #tpu.memory_space<vmem>>, vector<1x1x128xf32>
    %27 = vector.shape_cast %26 : vector<1x1x128xf32> to vector<1x128xf32>
    %c7 = arith.constant 7 : index
    %28 = memref.load %arg1[%c7] : memref<32xi32, #tpu.memory_space<smem>>
    %29 = arith.index_cast %28 : i32 to index
    %c0_14 = arith.constant 0 : index
    %c0_15 = arith.constant 0 : index
    %30 = vector.load %arg2[%29, %c0_14, %c0_15] : memref<95x1x128xf32, #tpu.memory_space<vmem>>, vector<1x1x128xf32>
    %31 = vector.shape_cast %30 : vector<1x1x128xf32> to vector<1x128xf32>
    %32 = tpu.concatenate %3, %7, %11, %15, %19, %23, %27, %31 in 0 : vector<1x128xf32>, vector<1x128xf32>, vector<1x128xf32>, vector<1x128xf32>, vector<1x128xf32>, vector<1x128xf32>, vector<1x128xf32>, vector<1x128xf32> -> vector<8x128xf32>
    %c0_16 = arith.constant 0 : index
    %c0_17 = arith.constant 0 : index
    %33 = vector.load %arg5[%c0_16, %c0_17] : memref<40x128xf32, #tpu.memory_space<vmem>>, vector<8x128xf32>
    tpu.vector_store %arg5[%c0_16, %c0_17], %32 {strides = array<i32>} : memref<40x128xf32, #tpu.memory_space<vmem>>, vector<8x128xf32>,
    %c8 = arith.constant 8 : index
    %34 = memref.load %arg1[%c8] : memref<32xi32, #tpu.memory_space<smem>>
    %35 = arith.index_cast %34 : i32 to index
    %c0_18 = arith.constant 0 : index
    %c0_19 = arith.constant 0 : index
    %36 = vector.load %arg2[%35, %c0_18, %c0_19] : memref<95x1x128xf32, #tpu.memory_space<vmem>>, vector<1x1x128xf32>
    %37 = vector.shape_cast %36 : vector<1x1x128xf32> to vector<1x128xf32>
    %c9 = arith.constant 9 : index
    %38 = memref.load %arg1[%c9] : memref<32xi32, #tpu.memory_space<smem>>
    %39 = arith.index_cast %38 : i32 to index
    %c0_20 = arith.constant 0 : index
    %c0_21 = arith.constant 0 : index
    %40 = vector.load %arg2[%39, %c0_20, %c0_21] : memref<95x1x128xf32, #tpu.memory_space<vmem>>, vector<1x1x128xf32>
    %41 = vector.shape_cast %40 : vector<1x1x128xf32> to vector<1x128xf32>
    %c10 = arith.constant 10 : index
    %42 = memref.load %arg1[%c10] : memref<32xi32, #tpu.memory_space<smem>>
    %43 = arith.index_cast %42 : i32 to index
    %c0_22 = arith.constant 0 : index
    %c0_23 = arith.constant 0 : index
    %44 = vector.load %arg2[%43, %c0_22, %c0_23] : memref<95x1x128xf32, #tpu.memory_space<vmem>>, vector<1x1x128xf32>
    %45 = vector.shape_cast %44 : vector<1x1x128xf32> to vector<1x128xf32>
    %c11 = arith.constant 11 : index
    %46 = memref.load %arg1[%c11] : memref<32xi32, #tpu.memory_space<smem>>
    %47 = arith.index_cast %46 : i32 to index
    %c0_24 = arith.constant 0 : index
    %c0_25 = arith.constant 0 : index
    %48 = vector.load %arg2[%47, %c0_24, %c0_25] : memref<95x1x128xf32, #tpu.memory_space<vmem>>, vector<1x1x128xf32>
    %49 = vector.shape_cast %48 : vector<1x1x128xf32> to vector<1x128xf32>
    %c12 = arith.constant 12 : index
    %50 = memref.load %arg1[%c12] : memref<32xi32, #tpu.memory_space<smem>>
    %51 = arith.index_cast %50 : i32 to index
    %c0_26 = arith.constant 0 : index
    %c0_27 = arith.constant 0 : index
    %52 = vector.load %arg2[%51, %c0_26, %c0_27] : memref<95x1x128xf32, #tpu.memory_space<vmem>>, vector<1x1x128xf32>
    %53 = vector.shape_cast %52 : vector<1x1x128xf32> to vector<1x128xf32>
    %c13 = arith.constant 13 : index
    %54 = memref.load %arg1[%c13] : memref<32xi32, #tpu.memory_space<smem>>
    %55 = arith.index_cast %54 : i32 to index
    %c0_28 = arith.constant 0 : index
    %c0_29 = arith.constant 0 : index
    %56 = vector.load %arg2[%55, %c0_28, %c0_29] : memref<95x1x128xf32, #tpu.memory_space<vmem>>, vector<1x1x128xf32>
    %57 = vector.shape_cast %56 : vector<1x1x128xf32> to vector<1x128xf32>
    %c14 = arith.constant 14 : index
    %58 = memref.load %arg1[%c14] : memref<32xi32, #tpu.memory_space<smem>>
    %59 = arith.index_cast %58 : i32 to index
    %c0_30 = arith.constant 0 : index
    %c0_31 = arith.constant 0 : index
    %60 = vector.load %arg2[%59, %c0_30, %c0_31] : memref<95x1x128xf32, #tpu.memory_space<vmem>>, vector<1x1x128xf32>
    %61 = vector.shape_cast %60 : vector<1x1x128xf32> to vector<1x128xf32>
    %c15 = arith.constant 15 : index
    %62 = memref.load %arg1[%c15] : memref<32xi32, #tpu.memory_space<smem>>
    %63 = arith.index_cast %62 : i32 to index
    %c0_32 = arith.constant 0 : index
    %c0_33 = arith.constant 0 : index
    %64 = vector.load %arg2[%63, %c0_32, %c0_33] : memref<95x1x128xf32, #tpu.memory_space<vmem>>, vector<1x1x128xf32>
    %65 = vector.shape_cast %64 : vector<1x1x128xf32> to vector<1x128xf32>
    %66 = tpu.concatenate %37, %41, %45, %49, %53, %57, %61, %65 in 0 : vector<1x128xf32>, vector<1x128xf32>, vector<1x128xf32>, vector<1x128xf32>, vector<1x128xf32>, vector<1x128xf32>, vector<1x128xf32>, vector<1x128xf32> -> vector<8x128xf32>
    %c8_34 = arith.constant 8 : index
    %c0_35 = arith.constant 0 : index
    %67 = vector.load %arg5[%c8_34, %c0_35] : memref<40x128xf32, #tpu.memory_space<vmem>>, vector<8x128xf32>
    tpu.vector_store %arg5[%c8_34, %c0_35], %66 {strides = array<i32>} : memref<40x128xf32, #tpu.memory_space<vmem>>, vector<8x128xf32>,
    %c16 = arith.constant 16 : index
    %68 = memref.load %arg1[%c16] : memref<32xi32, #tpu.memory_space<smem>>
    %69 = arith.index_cast %68 : i32 to index
    %c0_36 = arith.constant 0 : index
    %c0_37 = arith.constant 0 : index
    %70 = vector.load %arg2[%69, %c0_36, %c0_37] : memref<95x1x128xf32, #tpu.memory_space<vmem>>, vector<1x1x128xf32>
    %71 = vector.shape_cast %70 : vector<1x1x128xf32> to vector<1x128xf32>
    %c17 = arith.constant 17 : index
    %72 = memref.load %arg1[%c17] : memref<32xi32, #tpu.memory_space<smem>>
    %73 = arith.index_cast %72 : i32 to index
    %c0_38 = arith.constant 0 : index
    %c0_39 = arith.constant 0 : index
    %74 = vector.load %arg2[%73, %c0_38, %c0_39] : memref<95x1x128xf32, #tpu.memory_space<vmem>>, vector<1x1x128xf32>
    %75 = vector.shape_cast %74 : vector<1x1x128xf32> to vector<1x128xf32>
    %c18 = arith.constant 18 : index
    %76 = memref.load %arg1[%c18] : memref<32xi32, #tpu.memory_space<smem>>
    %77 = arith.index_cast %76 : i32 to index
    %c0_40 = arith.constant 0 : index
    %c0_41 = arith.constant 0 : index
    %78 = vector.load %arg2[%77, %c0_40, %c0_41] : memref<95x1x128xf32, #tpu.memory_space<vmem>>, vector<1x1x128xf32>
    %79 = vector.shape_cast %78 : vector<1x1x128xf32> to vector<1x128xf32>
    %c19 = arith.constant 19 : index
    %80 = memref.load %arg1[%c19] : memref<32xi32, #tpu.memory_space<smem>>
    %81 = arith.index_cast %80 : i32 to index
    %c0_42 = arith.constant 0 : index
    %c0_43 = arith.constant 0 : index
    %82 = vector.load %arg2[%81, %c0_42, %c0_43] : memref<95x1x128xf32, #tpu.memory_space<vmem>>, vector<1x1x128xf32>
    %83 = vector.shape_cast %82 : vector<1x1x128xf32> to vector<1x128xf32>
    %c20 = arith.constant 20 : index
    %84 = memref.load %arg1[%c20] : memref<32xi32, #tpu.memory_space<smem>>
    %85 = arith.index_cast %84 : i32 to index
    %c0_44 = arith.constant 0 : index
    %c0_45 = arith.constant 0 : index
    %86 = vector.load %arg2[%85, %c0_44, %c0_45] : memref<95x1x128xf32, #tpu.memory_space<vmem>>, vector<1x1x128xf32>
    %87 = vector.shape_cast %86 : vector<1x1x128xf32> to vector<1x128xf32>
    %c21 = arith.constant 21 : index
    %88 = memref.load %arg1[%c21] : memref<32xi32, #tpu.memory_space<smem>>
    %89 = arith.index_cast %88 : i32 to index
    %c0_46 = arith.constant 0 : index
    %c0_47 = arith.constant 0 : index
    %90 = vector.load %arg2[%89, %c0_46, %c0_47] : memref<95x1x128xf32, #tpu.memory_space<vmem>>, vector<1x1x128xf32>
    %91 = vector.shape_cast %90 : vector<1x1x128xf32> to vector<1x128xf32>
    %c22 = arith.constant 22 : index
    %92 = memref.load %arg1[%c22] : memref<32xi32, #tpu.memory_space<smem>>
    %93 = arith.index_cast %92 : i32 to index
    %c0_48 = arith.constant 0 : index
    %c0_49 = arith.constant 0 : index
    %94 = vector.load %arg2[%93, %c0_48, %c0_49] : memref<95x1x128xf32, #tpu.memory_space<vmem>>, vector<1x1x128xf32>
    %95 = vector.shape_cast %94 : vector<1x1x128xf32> to vector<1x128xf32>
    %c23 = arith.constant 23 : index
    %96 = memref.load %arg1[%c23] : memref<32xi32, #tpu.memory_space<smem>>
    %97 = arith.index_cast %96 : i32 to index
    %c0_50 = arith.constant 0 : index
    %c0_51 = arith.constant 0 : index
    %98 = vector.load %arg2[%97, %c0_50, %c0_51] : memref<95x1x128xf32, #tpu.memory_space<vmem>>, vector<1x1x128xf32>
    %99 = vector.shape_cast %98 : vector<1x1x128xf32> to vector<1x128xf32>
    %100 = tpu.concatenate %71, %75, %79, %83, %87, %91, %95, %99 in 0 : vector<1x128xf32>, vector<1x128xf32>, vector<1x128xf32>, vector<1x128xf32>, vector<1x128xf32>, vector<1x128xf32>, vector<1x128xf32>, vector<1x128xf32> -> vector<8x128xf32>
    %c16_52 = arith.constant 16 : index
    %c0_53 = arith.constant 0 : index
    %101 = vector.load %arg5[%c16_52, %c0_53] : memref<40x128xf32, #tpu.memory_space<vmem>>, vector<8x128xf32>
    tpu.vector_store %arg5[%c16_52, %c0_53], %100 {strides = array<i32>} : memref<40x128xf32, #tpu.memory_space<vmem>>, vector<8x128xf32>,
    %c24 = arith.constant 24 : index
    %102 = memref.load %arg1[%c24] : memref<32xi32, #tpu.memory_space<smem>>
    %103 = arith.index_cast %102 : i32 to index
    %c0_54 = arith.constant 0 : index
    %c0_55 = arith.constant 0 : index
    %104 = vector.load %arg2[%103, %c0_54, %c0_55] : memref<95x1x128xf32, #tpu.memory_space<vmem>>, vector<1x1x128xf32>
    %105 = vector.shape_cast %104 : vector<1x1x128xf32> to vector<1x128xf32>
    %c25 = arith.constant 25 : index
    %106 = memref.load %arg1[%c25] : memref<32xi32, #tpu.memory_space<smem>>
    %107 = arith.index_cast %106 : i32 to index
    %c0_56 = arith.constant 0 : index
    %c0_57 = arith.constant 0 : index
    %108 = vector.load %arg2[%107, %c0_56, %c0_57] : memref<95x1x128xf32, #tpu.memory_space<vmem>>, vector<1x1x128xf32>
    %109 = vector.shape_cast %108 : vector<1x1x128xf32> to vector<1x128xf32>
    %c26 = arith.constant 26 : index
    %110 = memref.load %arg1[%c26] : memref<32xi32, #tpu.memory_space<smem>>
    %111 = arith.index_cast %110 : i32 to index
    %c0_58 = arith.constant 0 : index
    %c0_59 = arith.constant 0 : index
    %112 = vector.load %arg2[%111, %c0_58, %c0_59] : memref<95x1x128xf32, #tpu.memory_space<vmem>>, vector<1x1x128xf32>
    %113 = vector.shape_cast %112 : vector<1x1x128xf32> to vector<1x128xf32>
    %c27 = arith.constant 27 : index
    %114 = memref.load %arg1[%c27] : memref<32xi32, #tpu.memory_space<smem>>
    %115 = arith.index_cast %114 : i32 to index
    %c0_60 = arith.constant 0 : index
    %c0_61 = arith.constant 0 : index
    %116 = vector.load %arg2[%115, %c0_60, %c0_61] : memref<95x1x128xf32, #tpu.memory_space<vmem>>, vector<1x1x128xf32>
    %117 = vector.shape_cast %116 : vector<1x1x128xf32> to vector<1x128xf32>
    %c28 = arith.constant 28 : index
    %118 = memref.load %arg1[%c28] : memref<32xi32, #tpu.memory_space<smem>>
    %119 = arith.index_cast %118 : i32 to index
    %c0_62 = arith.constant 0 : index
    %c0_63 = arith.constant 0 : index
    %120 = vector.load %arg2[%119, %c0_62, %c0_63] : memref<95x1x128xf32, #tpu.memory_space<vmem>>, vector<1x1x128xf32>
    %121 = vector.shape_cast %120 : vector<1x1x128xf32> to vector<1x128xf32>
    %c29 = arith.constant 29 : index
    %122 = memref.load %arg1[%c29] : memref<32xi32, #tpu.memory_space<smem>>
    %123 = arith.index_cast %122 : i32 to index
    %c0_64 = arith.constant 0 : index
    %c0_65 = arith.constant 0 : index
    %124 = vector.load %arg2[%123, %c0_64, %c0_65] : memref<95x1x128xf32, #tpu.memory_space<vmem>>, vector<1x1x128xf32>
    %125 = vector.shape_cast %124 : vector<1x1x128xf32> to vector<1x128xf32>
    %c30 = arith.constant 30 : index
    %126 = memref.load %arg1[%c30] : memref<32xi32, #tpu.memory_space<smem>>
    %127 = arith.index_cast %126 : i32 to index
    %c0_66 = arith.constant 0 : index
    %c0_67 = arith.constant 0 : index
    %128 = vector.load %arg2[%127, %c0_66, %c0_67] : memref<95x1x128xf32, #tpu.memory_space<vmem>>, vector<1x1x128xf32>
    %129 = vector.shape_cast %128 : vector<1x1x128xf32> to vector<1x128xf32>
    %c31 = arith.constant 31 : index
    %130 = memref.load %arg1[%c31] : memref<32xi32, #tpu.memory_space<smem>>
    %131 = arith.index_cast %130 : i32 to index
    %c0_68 = arith.constant 0 : index
    %c0_69 = arith.constant 0 : index
    %132 = vector.load %arg2[%131, %c0_68, %c0_69] : memref<95x1x128xf32, #tpu.memory_space<vmem>>, vector<1x1x128xf32>
    %133 = vector.shape_cast %132 : vector<1x1x128xf32> to vector<1x128xf32>
    %134 = tpu.concatenate %105, %109, %113, %117, %121, %125, %129, %133 in 0 : vector<1x128xf32>, vector<1x128xf32>, vector<1x128xf32>, vector<1x128xf32>, vector<1x128xf32>, vector<1x128xf32>, vector<1x128xf32>, vector<1x128xf32> -> vector<8x128xf32>
    %c24_70 = arith.constant 24 : index
    %c0_71 = arith.constant 0 : index
    %135 = vector.load %arg5[%c24_70, %c0_71] : memref<40x128xf32, #tpu.memory_space<vmem>>, vector<8x128xf32>
    tpu.vector_store %arg5[%c24_70, %c0_71], %134 {strides = array<i32>} : memref<40x128xf32, #tpu.memory_space<vmem>>, vector<8x128xf32>,
    %c0_72 = arith.constant 0 : index
    %c0_73 = arith.constant 0 : index
    %136 = vector.load %arg3[%c0_72, %c0_73] : memref<8x128xf32, #tpu.memory_space<vmem>>, vector<8x128xf32>
    %c0_74 = arith.constant 0 : index
    %c0_75 = arith.constant 0 : index
    %137 = vector.load %arg4[%c0_74, %c0_75] : memref<8x128xf32, #tpu.memory_space<vmem>>, vector<8x128xf32>
    %138 = arith.mulf %136, %137 : vector<8x128xf32>
    %c32 = arith.constant 32 : index
    %c0_76 = arith.constant 0 : index
    %139 = vector.load %arg5[%c32, %c0_76] : memref<40x128xf32, #tpu.memory_space<vmem>>, vector<8x128xf32>
    tpu.vector_store %arg5[%c32, %c0_76], %138 {strides = array<i32>} : memref<40x128xf32, #tpu.memory_space<vmem>>, vector<8x128xf32>,
    return
  }
  func.func @transform_0(%arg0: i32, %arg1: memref<32xi32, #tpu.memory_space<smem>>) -> (i32, i32, i32) {
    %c0_i32 = arith.constant 0 : i32
    %c0_i32_0 = arith.constant 0 : i32
    %c0_i32_1 = arith.constant 0 : i32
    %c0_i32_2 = arith.constant 0 : i32
    return %c0_i32, %c0_i32_0, %c0_i32_1 : i32, i32, i32
  }
  func.func @transform_1(%arg0: i32, %arg1: memref<32xi32, #tpu.memory_space<smem>>) -> (i32, i32) {
    %c0_i32 = arith.constant 0 : i32
    %c0_i32_0 = arith.constant 0 : i32
    %c0_i32_1 = arith.constant 0 : i32
    return %c0_i32, %c0_i32_0 : i32, i32
  }
  func.func @transform_2(%arg0: i32, %arg1: memref<32xi32, #tpu.memory_space<smem>>) -> (i32, i32) {
    %c0_i32 = arith.constant 0 : i32
    %c0_i32_0 = arith.constant 0 : i32
    %c0_i32_1 = arith.constant 0 : i32
    return %c0_i32, %c0_i32_0 : i32, i32
  }
  func.func @transform_3(%arg0: i32, %arg1: memref<32xi32, #tpu.memory_space<smem>>) -> (i32, i32) {
    %c0_i32 = arith.constant 0 : i32
    %c0_i32_0 = arith.constant 0 : i32
    %c0_i32_1 = arith.constant 0 : i32
    return %c0_i32, %c0_i32_0 : i32, i32
  }
}

</mosaic_0001>

<llo_original>
// kernel: tpu_custom_call.1
$region0: #{tpu_custom_call.1}
  #allocation0 [shape = 'u32[]', space=smem, size = 0x4, offset = 0x4, fixed_abs, tag = 'smem constant byte address 0x4 - core index']
  #allocation1 [shape = 'u32[72,128]{1,0:T(1,128)}', space=vmem, size = 0x9000, scoped, tag = 'internal scratch']
  #allocation2 [shape = 's32[1]{0}', space=sflag, size = 0x4, scoped, tag = 'scoped memory for tpu_custom_call.1']
  #allocation3 [shape = 'u8[512]{0}', space=smem, size = 0x200, scoped, tag = 'prefetched SMEM operand 0']
  %s0 = inlined_call_operand.hbm [shape: s32[32], index: 0, kind: input, shape index: {}]
  %s1 = inlined_call_operand.hbm [shape: f32[95,1,128], index: 1, kind: input, shape index: {}]
  %s2 = inlined_call_operand.hbm [shape: f32[8,128], index: 2, kind: input, shape index: {}]
  %s3 = inlined_call_operand.hbm [shape: f32[8,128], index: 3, kind: input, shape index: {}]
  %s4 = inlined_call_operand.hbm [shape: f32[40,128], index: 4, kind: output, shape index: {}]
  %s5 = sld [smem:[#allocation0]]
  $region34: #{tpu_custom_call.1} parent=0
    _
  %s7 = ssub.s32 1, %s5
  %s8 = scalar_select 0, %s7, %s5
  %s10 = sshll.u32 %s0, 4
  %s11 = int_to_ptr.hbm [resolvable:$true] %s10
  %13 = dma.hbm_to_smem %s11, 16, [#allocation3], [#allocation2]
  %15 = dma.done [#allocation2], 16
  %16 = sfence
  $region1: #{tpu_custom_call.1} parent=0
    #allocation4 [shape = 'u8[48640]{0}', space=vmem, size = 0xc000, scoped, tag = 'input window, operand 1, single buffered']
    #allocation5 [shape = 's32[1]{0}', space=sflag, size = 0x4, scoped, tag = 'scoped memory for tpu_custom_call.1']
    #allocation6 [shape = 's32[1]{0}', space=sflag, size = 0x4, scoped, tag = 'scoped memory for tpu_custom_call.1']
    #allocation7 [shape = 'u8[4096]{0}', space=vmem, size = 0x1000, scoped, tag = 'input window, operand 2, single buffered']
    #allocation8 [shape = 's32[1]{0}', space=sflag, size = 0x4, scoped, tag = 'scoped memory for tpu_custom_call.1']
    #allocation9 [shape = 'u8[4096]{0}', space=vmem, size = 0x1000, scoped, tag = 'input window, operand 3, single buffered']
    #allocation10 [shape = 'u8[20480]{0}', space=vmem, size = 0x5000, scoped, tag = 'output window, operand 0, single buffered']
    %17 = vsyncpa [#allocation5], 0
    %18 = vsyncpa [#allocation8], 0
    %19 = vsyncpa [#allocation6], 0
    // Predicated region
    $region2: #{tpu_custom_call.1} parent=1 // pred_check
      _
    $region3: #{tpu_custom_call.1} parent=1 // pred_check_branch
      %21 = sbr.rel (0) target = $region5
    $region4: #{tpu_custom_call.1} parent=1 // pred_region
      %23 = vsyncadd [#allocation5], 0
      %s24 = sshll.u32 %s1, 4
      %s25 = int_to_ptr.hbm [resolvable:$true] %s24
      %s26 = sshll.u32 [#allocation4], 4
      %s27 = int_to_ptr.vmem [resolvable:$true] %s26
      %32 = dma.hbm_to_vmem [thread:$0]  %s25, 1520, %s27, [#allocation5], 16, 16, 1
    $region5: #{tpu_custom_call.1} parent=1 // pred_fallthru
      _
    // Predicated region
    $region6: #{tpu_custom_call.1} parent=1 // pred_check
      _
    $region7: #{tpu_custom_call.1} parent=1 // pred_check_branch
      %34 = sbr.rel (0) target = $region9
    $region8: #{tpu_custom_call.1} parent=1 // pred_region
      %36 = vsyncadd [#allocation8], 0
      %s38 = sshll.u32 %s2, 4
      %s39 = int_to_ptr.hbm [resolvable:$true] %s38
      %s40 = sshll.u32 [#allocation7], 4
      %s41 = int_to_ptr.vmem [resolvable:$true] %s40
      %43 = dma.hbm_to_vmem [thread:$0]  %s39, 128, %s41, [#allocation8]
    $region9: #{tpu_custom_call.1} parent=1 // pred_fallthru
      _
    // Predicated region
    $region10: #{tpu_custom_call.1} parent=1 // pred_check
      _
    $region11: #{tpu_custom_call.1} parent=1 // pred_check_branch
      %45 = sbr.rel (0) target = $region13
    $region12: #{tpu_custom_call.1} parent=1 // pred_region
      %47 = vsyncadd [#allocation8], 0
      %s49 = sshll.u32 %s3, 4
      %s50 = int_to_ptr.hbm [resolvable:$true] %s49
      %s51 = sshll.u32 [#allocation9], 4
      %s52 = int_to_ptr.vmem [resolvable:$true] %s51
      %54 = dma.hbm_to_vmem [thread:$0]  %s50, 128, %s52, [#allocation8]
    $region13: #{tpu_custom_call.1} parent=1 // pred_fallthru
      _
    // Predicated region
    $region14: #{tpu_custom_call.1} parent=1 // pred_check
      _
    $region15: #{tpu_custom_call.1} parent=1 // pred_check_branch
      %56 = sbr.rel (0) target = $region17
    $region16: #{tpu_custom_call.1} parent=1 // pred_region
      %58 = dma.done [#allocation5], 1520
    $region17: #{tpu_custom_call.1} parent=1 // pred_fallthru
      _
    // Predicated region
    $region18: #{tpu_custom_call.1} parent=1 // pred_check
      _
    $region19: #{tpu_custom_call.1} parent=1 // pred_check_branch
      %60 = sbr.rel (0) target = $region21
    $region20: #{tpu_custom_call.1} parent=1 // pred_region
      %62 = dma.done [#allocation8], 128
    $region21: #{tpu_custom_call.1} parent=1 // pred_fallthru
      _
    // Predicated region
    $region22: #{tpu_custom_call.1} parent=1 // pred_check
      _
    $region23: #{tpu_custom_call.1} parent=1 // pred_check_branch
      %64 = sbr.rel (0) target = $region25
    $region24: #{tpu_custom_call.1} parent=1 // pred_region
      %66 = dma.done [#allocation8], 128
    $region25: #{tpu_custom_call.1} parent=1 // pred_fallthru
      _
    %s67 = sld [smem:[#allocation3]]
    %s68 = scalar_lea.vmem [#allocation4], %s67
    %v69 = vld [vmem:[%s68] sm:$0x1]
    %s70 = sld [smem:[#allocation3 + $0x1]]
    %s71 = scalar_lea.vmem [#allocation4], %s70
    %v72 = vld [vmem:[%s71] sm:$0x1]
    %s73 = sld [smem:[#allocation3 + $0x2]]
    %s74 = scalar_lea.vmem [#allocation4], %s73
    %v75 = vld [vmem:[%s74] sm:$0x1]
    %s76 = sld [smem:[#allocation3 + $0x3]]
    %s77 = scalar_lea.vmem [#allocation4], %s76
    %v78 = vld [vmem:[%s77] sm:$0x1]
    %s79 = sld [smem:[#allocation3 + $0x4]]
    %s80 = scalar_lea.vmem [#allocation4], %s79
    %v81 = vld [vmem:[%s80] sm:$0x1]
    %s82 = sld [smem:[#allocation3 + $0x5]]
    %s83 = scalar_lea.vmem [#allocation4], %s82
    %v84 = vld [vmem:[%s83] sm:$0x1]
    %s85 = sld [smem:[#allocation3 + $0x6]]
    %s86 = scalar_lea.vmem [#allocation4], %s85
    %v87 = vld [vmem:[%s86] sm:$0x1]
    %s88 = sld [smem:[#allocation3 + $0x7]]
    %s89 = scalar_lea.vmem [#allocation4], %s88
    %v90 = vld [vmem:[%s89] sm:$0x1]
    %v92 = vperm.slane %v72, 0
    %v95 = vperm.slane %v75, 0
    %v98 = vperm.slane %v78, 0
    %v101 = vperm.slane %v81, 0
    %v104 = vperm.slane %v84, 0
    %v107 = vperm.slane %v87, 0
    %v110 = vperm.slane %v90, 0
    %vm112 = vcmask 1040384
    %v113 = vsel %vm112, %v69, %v92
    %vm114 = vcmask 1041408
    %v115 = vsel %vm114, %v113, %v95
    %vm116 = vcmask 1042432
    %v117 = vsel %vm116, %v115, %v98
    %vm118 = vcmask 1043456
    %v119 = vsel %vm118, %v117, %v101
    %vm120 = vcmask 1044480
    %v121 = vsel %vm120, %v119, %v104
    %vm122 = vcmask 1045504
    %v123 = vsel %vm122, %v121, %v107
    %vm124 = vcmask 1046528
    %v125 = vsel %vm124, %v123, %v110
    %126 = vst [vmem:[#allocation10] sm:$0xff] %v125
    %s127 = sld [smem:[#allocation3 + $0x8]]
    %s128 = scalar_lea.vmem [#allocation4], %s127
    %v129 = vld [vmem:[%s128] sm:$0x1]
    %s130 = sld [smem:[#allocation3 + $0x9]]
    %s131 = scalar_lea.vmem [#allocation4], %s130
    %v132 = vld [vmem:[%s131] sm:$0x1]
    %s133 = sld [smem:[#allocation3 + $0xa]]
    %s134 = scalar_lea.vmem [#allocation4], %s133
    %v135 = vld [vmem:[%s134] sm:$0x1]
    %s136 = sld [smem:[#allocation3 + $0xb]]
    %s137 = scalar_lea.vmem [#allocation4], %s136
    %v138 = vld [vmem:[%s137] sm:$0x1]
    %s139 = sld [smem:[#allocation3 + $0xc]]
    %s140 = scalar_lea.vmem [#allocation4], %s139
    %v141 = vld [vmem:[%s140] sm:$0x1]
    %s142 = sld [smem:[#allocation3 + $0xd]]
    %s143 = scalar_lea.vmem [#allocation4], %s142
    %v144 = vld [vmem:[%s143] sm:$0x1]
    %s145 = sld [smem:[#allocation3 + $0xe]]
    %s146 = scalar_lea.vmem [#allocation4], %s145
    %v147 = vld [vmem:[%s146] sm:$0x1]
    %s148 = sld [smem:[#allocation3 + $0xf]]
    %s149 = scalar_lea.vmem [#allocation4], %s148
    %v150 = vld [vmem:[%s149] sm:$0x1]
    %v152 = vperm.slane %v132, 0
    %v155 = vperm.slane %v135, 0
    %v158 = vperm.slane %v138, 0
    %v161 = vperm.slane %v141, 0
    %v164 = vperm.slane %v144, 0
    %v167 = vperm.slane %v147, 0
    %v170 = vperm.slane %v150, 0
    %v172 = vsel %vm112, %v129, %v152
    %v173 = vsel %vm114, %v172, %v155
    %v174 = vsel %vm116, %v173, %v158
    %v175 = vsel %vm118, %v174, %v161
    %v176 = vsel %vm120, %v175, %v164
    %v177 = vsel %vm122, %v176, %v167
    %v178 = vsel %vm124, %v177, %v170
    %179 = vst [vmem:[#allocation10 + $0x8] sm:$0xff] %v178
    %s180 = sld [smem:[#allocation3 + $0x10]]
    %s181 = scalar_lea.vmem [#allocation4], %s180
    %v182 = vld [vmem:[%s181] sm:$0x1]
    %s183 = sld [smem:[#allocation3 + $0x11]]
    %s184 = scalar_lea.vmem [#allocation4], %s183
    %v185 = vld [vmem:[%s184] sm:$0x1]
    %s186 = sld [smem:[#allocation3 + $0x12]]
    %s187 = scalar_lea.vmem [#allocation4], %s186
    %v188 = vld [vmem:[%s187] sm:$0x1]
    %s189 = sld [smem:[#allocation3 + $0x13]]
    %s190 = scalar_lea.vmem [#allocation4], %s189
    %v191 = vld [vmem:[%s190] sm:$0x1]
    %s192 = sld [smem:[#allocation3 + $0x14]]
    %s193 = scalar_lea.vmem [#allocation4], %s192
    %v194 = vld [vmem:[%s193] sm:$0x1]
    %s195 = sld [smem:[#allocation3 + $0x15]]
    %s196 = scalar_lea.vmem [#allocation4], %s195
    %v197 = vld [vmem:[%s196] sm:$0x1]
    %s198 = sld [smem:[#allocation3 + $0x16]]
    %s199 = scalar_lea.vmem [#allocation4], %s198
    %v200 = vld [vmem:[%s199] sm:$0x1]
    %s201 = sld [smem:[#allocation3 + $0x17]]
    %s202 = scalar_lea.vmem [#allocation4], %s201
    %v203 = vld [vmem:[%s202] sm:$0x1]
    %v205 = vperm.slane %v185, 0
    %v208 = vperm.slane %v188, 0
    %v211 = vperm.slane %v191, 0
    %v214 = vperm.slane %v194, 0
    %v217 = vperm.slane %v197, 0
    %v220 = vperm.slane %v200, 0
    %v223 = vperm.slane %v203, 0
    %v225 = vsel %vm112, %v182, %v205
    %v226 = vsel %vm114, %v225, %v208
    %v227 = vsel %vm116, %v226, %v211
    %v228 = vsel %vm118, %v227, %v214
    %v229 = vsel %vm120, %v228, %v217
    %v230 = vsel %vm122, %v229, %v220
    %v231 = vsel %vm124, %v230, %v223
    %232 = vst [vmem:[#allocation10 + $0x10] sm:$0xff] %v231
    %s233 = sld [smem:[#allocation3 + $0x18]]
    %s234 = scalar_lea.vmem [#allocation4], %s233
    %v235 = vld [vmem:[%s234] sm:$0x1]
    %s236 = sld [smem:[#allocation3 + $0x19]]
    %s237 = scalar_lea.vmem [#allocation4], %s236
    %v238 = vld [vmem:[%s237] sm:$0x1]
    %s239 = sld [smem:[#allocation3 + $0x1a]]
    %s240 = scalar_lea.vmem [#allocation4], %s239
    %v241 = vld [vmem:[%s240] sm:$0x1]
    %s242 = sld [smem:[#allocation3 + $0x1b]]
    %s243 = scalar_lea.vmem [#allocation4], %s242
    %v244 = vld [vmem:[%s243] sm:$0x1]
    %s245 = sld [smem:[#allocation3 + $0x1c]]
    %s246 = scalar_lea.vmem [#allocation4], %s245
    %v247 = vld [vmem:[%s246] sm:$0x1]
    %s248 = sld [smem:[#allocation3 + $0x1d]]
    %s249 = scalar_lea.vmem [#allocation4], %s248
    %v250 = vld [vmem:[%s249] sm:$0x1]
    %s251 = sld [smem:[#allocation3 + $0x1e]]
    %s252 = scalar_lea.vmem [#allocation4], %s251
    %v253 = vld [vmem:[%s252] sm:$0x1]
    %s254 = sld [smem:[#allocation3 + $0x1f]]
    %s255 = scalar_lea.vmem [#allocation4], %s254
    %v256 = vld [vmem:[%s255] sm:$0x1]
    %v258 = vperm.slane %v238, 0
    %v261 = vperm.slane %v241, 0
    %v264 = vperm.slane %v244, 0
    %v267 = vperm.slane %v247, 0
    %v270 = vperm.slane %v250, 0
    %v273 = vperm.slane %v253, 0
    %v276 = vperm.slane %v256, 0
    %v278 = vsel %vm112, %v235, %v258
    %v279 = vsel %vm114, %v278, %v261
    %v280 = vsel %vm116, %v279, %v264
    %v281 = vsel %vm118, %v280, %v267
    %v282 = vsel %vm120, %v281, %v270
    %v283 = vsel %vm122, %v282, %v273
    %v284 = vsel %vm124, %v283, %v276
    %285 = vst [vmem:[#allocation10 + $0x18] sm:$0xff] %v284
    %v286 = vld [vmem:[#allocation7] sm:$0xff]
    %v287 = vld [vmem:[#allocation9] sm:$0xff]
    %v288 = vmul.f32 %v286, %v287
    %289 = vst [vmem:[#allocation10 + $0x20] sm:$0xff] %v288
    // Predicated region
    $region26: #{tpu_custom_call.1} parent=1 // pred_check
      _
    $region27: #{tpu_custom_call.1} parent=1 // pred_check_branch
      %291 = sbr.rel (0) target = $region29
    $region28: #{tpu_custom_call.1} parent=1 // pred_region
      %293 = vsyncadd [#allocation6], 0
      %s294 = sshll.u32 [#allocation10], 4
      %s295 = int_to_ptr.vmem [resolvable:$true] %s294
      %s296 = sshll.u32 %s4, 4
      %s297 = int_to_ptr.hbm [resolvable:$true] %s296
      %302 = dma.vmem_to_hbm [thread:$0]  %s295, 640, %s297, [#allocation6], 128, 128, 8
    $region29: #{tpu_custom_call.1} parent=1 // pred_fallthru
      _
    // Predicated region
    $region30: #{tpu_custom_call.1} parent=1 // pred_check
      _
    $region31: #{tpu_custom_call.1} parent=1 // pred_check_branch
      %304 = sbr.rel (0) target = $region33
    $region32: #{tpu_custom_call.1} parent=1 // pred_region
      %306 = dma.done [#allocation6], 640
    $region33: #{tpu_custom_call.1} parent=1 // pred_fallthru
      _
    %307 = vsyncpa [#allocation5], 1
    %308 = vsyncpa [#allocation8], 1
    %309 = vsyncpa [#allocation6], 1

// kernel: tpu_custom_call.1
$region0: #{tpu_custom_call.1}
  #allocation0 [shape = 'u32[]', space=smem, size = 0x4, offset = 0x4, fixed_abs, tag = 'smem constant byte address 0x4 - core index']
  #allocation1 [shape = 'u32[72,128]{1,0:T(1,128)}', space=vmem, size = 0x9000, scoped, tag = 'internal scratch']
  #allocation2 [shape = 's32[1]{0}', space=sflag, size = 0x4, scoped, tag = 'scoped memory for tpu_custom_call.1']
  #allocation3 [shape = 'u8[512]{0}', space=smem, size = 0x200, scoped, tag = 'prefetched SMEM operand 0']
  %s0 = inlined_call_operand.hbm [shape: s32[32], index: 0, kind: input, shape index: {}]
  %s1 = inlined_call_operand.hbm [shape: f32[95,1,128], index: 1, kind: input, shape index: {}]
  %s2 = inlined_call_operand.hbm [shape: f32[8,128], index: 2, kind: input, shape index: {}]
  %s3 = inlined_call_operand.hbm [shape: f32[8,128], index: 3, kind: input, shape index: {}]
  %s4 = inlined_call_operand.hbm [shape: f32[40,128], index: 4, kind: output, shape index: {}]
  %s5 = sld [smem:[#allocation0]]
  $region34: #{tpu_custom_call.1} parent=0
    _
  %s7 = ssub.s32 1, %s5
  %s8 = scalar_select 0, %s7, %s5
  %s10 = sshll.u32 %s0, 4
  %s11 = int_to_ptr.hbm [resolvable:$true] %s10
  %13 = dma.hbm_to_smem %s11, 16, [#allocation3], [#allocation2]
  %15 = dma.done [#allocation2], 16
  %16 = sfence
  $region1: #{tpu_custom_call.1} parent=0
    #allocation4 [shape = 'u8[48640]{0}', space=vmem, size = 0xc000, scoped, tag = 'input window, operand 1, single buffered']
    #allocation5 [shape = 's32[1]{0}', space=sflag, size = 0x4, scoped, tag = 'scoped memory for tpu_custom_call.1']
    #allocation6 [shape = 's32[1]{0}', space=sflag, size = 0x4, scoped, tag = 'scoped memory for tpu_custom_call.1']
    #allocation7 [shape = 'u8[4096]{0}', space=vmem, size = 0x1000, scoped, tag = 'input window, operand 2, single buffered']
    #allocation8 [shape = 's32[1]{0}', space=sflag, size = 0x4, scoped, tag = 'scoped memory for tpu_custom_call.1']
    #allocation9 [shape = 'u8[4096]{0}', space=vmem, size = 0x1000, scoped, tag = 'input window, operand 3, single buffered']
    #allocation10 [shape = 'u8[20480]{0}', space=vmem, size = 0x5000, scoped, tag = 'output window, operand 0, single buffered']
    %17 = vsyncpa [#allocation5], 0
    %18 = vsyncpa [#allocation8], 0
    %19 = vsyncpa [#allocation6], 0
    // Predicated region
    $region2: #{tpu_custom_call.1} parent=1 // pred_check
      _
    $region3: #{tpu_custom_call.1} parent=1 // pred_check_branch
      %21 = sbr.rel (0) target = $region5
    $region4: #{tpu_custom_call.1} parent=1 // pred_region
      %23 = vsyncadd [#allocation5], 0
      %s24 = sshll.u32 %s1, 4
      %s25 = int_to_ptr.hbm [resolvable:$true] %s24
      %s26 = sshll.u32 [#allocation4], 4
      %s27 = int_to_ptr.vmem [resolvable:$true] %s26
      %32 = dma.hbm_to_vmem [thread:$0]  %s25, 1520, %s27, [#allocation5], 16, 16, 1
    $region5: #{tpu_custom_call.1} parent=1 // pred_fallthru
      _
    // Predicated region
    $region6: #{tpu_custom_call.1} parent=1 // pred_check
      _
    $region7: #{tpu_custom_call.1} parent=1 // pred_check_branch
      %34 = sbr.rel (0) target = $region9
    $region8: #{tpu_custom_call.1} parent=1 // pred_region
      %36 = vsyncadd [#allocation8], 0
      %s38 = sshll.u32 %s2, 4
      %s39 = int_to_ptr.hbm [resolvable:$true] %s38
      %s40 = sshll.u32 [#allocation7], 4
      %s41 = int_to_ptr.vmem [resolvable:$true] %s40
      %43 = dma.hbm_to_vmem [thread:$0]  %s39, 128, %s41, [#allocation8]
    $region9: #{tpu_custom_call.1} parent=1 // pred_fallthru
      _
    // Predicated region
    $region10: #{tpu_custom_call.1} parent=1 // pred_check
      _
    $region11: #{tpu_custom_call.1} parent=1 // pred_check_branch
      %45 = sbr.rel (0) target = $region13
    $region12: #{tpu_custom_call.1} parent=1 // pred_region
      %47 = vsyncadd [#allocation8], 0
      %s49 = sshll.u32 %s3, 4
      %s50 = int_to_ptr.hbm [resolvable:$true] %s49
      %s51 = sshll.u32 [#allocation9], 4
      %s52 = int_to_ptr.vmem [resolvable:$true] %s51
      %54 = dma.hbm_to_vmem [thread:$0]  %s50, 128, %s52, [#allocation8]
    $region13: #{tpu_custom_call.1} parent=1 // pred_fallthru
      _
    // Predicated region
    $region14: #{tpu_custom_call.1} parent=1 // pred_check
      _
    $region15: #{tpu_custom_call.1} parent=1 // pred_check_branch
      %56 = sbr.rel (0) target = $region17
    $region16: #{tpu_custom_call.1} parent=1 // pred_region
      %58 = dma.done [#allocation5], 1520
    $region17: #{tpu_custom_call.1} parent=1 // pred_fallthru
      _
    // Predicated region
    $region18: #{tpu_custom_call.1} parent=1 // pred_check
      _
    $region19: #{tpu_custom_call.1} parent=1 // pred_check_branch
      %60 = sbr.rel (0) target = $region21
    $region20: #{tpu_custom_call.1} parent=1 // pred_region
      %62 = dma.done [#allocation8], 128
    $region21: #{tpu_custom_call.1} parent=1 // pred_fallthru
      _
    // Predicated region
    $region22: #{tpu_custom_call.1} parent=1 // pred_check
      _
    $region23: #{tpu_custom_call.1} parent=1 // pred_check_branch
      %64 = sbr.rel (0) target = $region25
    $region24: #{tpu_custom_call.1} parent=1 // pred_region
      %66 = dma.done [#allocation8], 128
    $region25: #{tpu_custom_call.1} parent=1 // pred_fallthru
      _
    %s67 = sld [smem:[#allocation3]]
    %s68 = scalar_lea.vmem [#allocation4], %s67
    %v69 = vld [vmem:[%s68] sm:$0x1]
    %s70 = sld [smem:[#allocation3 + $0x1]]
    %s71 = scalar_lea.vmem [#allocation4], %s70
    %v72 = vld [vmem:[%s71] sm:$0x1]
    %s73 = sld [smem:[#allocation3 + $0x2]]
    %s74 = scalar_lea.vmem [#allocation4], %s73
    %v75 = vld [vmem:[%s74] sm:$0x1]
    %s76 = sld [smem:[#allocation3 + $0x3]]
    %s77 = scalar_lea.vmem [#allocation4], %s76
    %v78 = vld [vmem:[%s77] sm:$0x1]
    %s79 = sld [smem:[#allocation3 + $0x4]]
    %s80 = scalar_lea.vmem [#allocation4], %s79
    %v81 = vld [vmem:[%s80] sm:$0x1]
    %s82 = sld [smem:[#allocation3 + $0x5]]
    %s83 = scalar_lea.vmem [#allocation4], %s82
    %v84 = vld [vmem:[%s83] sm:$0x1]
    %s85 = sld [smem:[#allocation3 + $0x6]]
    %s86 = scalar_lea.vmem [#allocation4], %s85
    %v87 = vld [vmem:[%s86] sm:$0x1]
    %s88 = sld [smem:[#allocation3 + $0x7]]
    %s89 = scalar_lea.vmem [#allocation4], %s88
    %v90 = vld [vmem:[%s89] sm:$0x1]
    %v92 = vperm.slane %v72, 0
    %v95 = vperm.slane %v75, 0
    %v98 = vperm.slane %v78, 0
    %v101 = vperm.slane %v81, 0
    %v104 = vperm.slane %v84, 0
    %v107 = vperm.slane %v87, 0
    %v110 = vperm.slane %v90, 0
    %vm112 = vcmask 1040384
    %v113 = vsel %vm112, %v69, %v92
    %vm114 = vcmask 1041408
    %v115 = vsel %vm114, %v113, %v95
    %vm116 = vcmask 1042432
    %v117 = vsel %vm116, %v115, %v98
    %vm118 = vcmask 1043456
    %v119 = vsel %vm118, %v117, %v101
    %vm120 = vcmask 1044480
    %v121 = vsel %vm120, %v119, %v104
    %vm122 = vcmask 1045504
    %v123 = vsel %vm122, %v121, %v107
    %vm124 = vcmask 1046528
    %v125 = vsel %vm124, %v123, %v110
    %126 = vst [vmem:[#allocation10] sm:$0xff] %v125
    %s127 = sld [smem:[#allocation3 + $0x8]]
    %s128 = scalar_lea.vmem [#allocation4], %s127
    %v129 = vld [vmem:[%s128] sm:$0x1]
    %s130 = sld [smem:[#allocation3 + $0x9]]
    %s131 = scalar_lea.vmem [#allocation4], %s130
    %v132 = vld [vmem:[%s131] sm:$0x1]
    %s133 = sld [smem:[#allocation3 + $0xa]]
    %s134 = scalar_lea.vmem [#allocation4], %s133
    %v135 = vld [vmem:[%s134] sm:$0x1]
    %s136 = sld [smem:[#allocation3 + $0xb]]
    %s137 = scalar_lea.vmem [#allocation4], %s136
    %v138 = vld [vmem:[%s137] sm:$0x1]
    %s139 = sld [smem:[#allocation3 + $0xc]]
    %s140 = scalar_lea.vmem [#allocation4], %s139
    %v141 = vld [vmem:[%s140] sm:$0x1]
    %s142 = sld [smem:[#allocation3 + $0xd]]
    %s143 = scalar_lea.vmem [#allocation4], %s142
    %v144 = vld [vmem:[%s143] sm:$0x1]
    %s145 = sld [smem:[#allocation3 + $0xe]]
    %s146 = scalar_lea.vmem [#allocation4], %s145
    %v147 = vld [vmem:[%s146] sm:$0x1]
    %s148 = sld [smem:[#allocation3 + $0xf]]
    %s149 = scalar_lea.vmem [#allocation4], %s148
    %v150 = vld [vmem:[%s149] sm:$0x1]
    %v152 = vperm.slane %v132, 0
    %v155 = vperm.slane %v135, 0
    %v158 = vperm.slane %v138, 0
    %v161 = vperm.slane %v141, 0
    %v164 = vperm.slane %v144, 0
    %v167 = vperm.slane %v147, 0
    %v170 = vperm.slane %v150, 0
    %v172 = vsel %vm112, %v129, %v152
    %v173 = vsel %vm114, %v172, %v155
    %v174 = vsel %vm116, %v173, %v158
    %v175 = vsel %vm118, %v174, %v161
    %v176 = vsel %vm120, %v175, %v164
    %v177 = vsel %vm122, %v176, %v167
    %v178 = vsel %vm124, %v177, %v170
    %179 = vst [vmem:[#allocation10 + $0x8] sm:$0xff] %v178
    %s180 = sld [smem:[#allocation3 + $0x10]]
    %s181 = scalar_lea.vmem [#allocation4], %s180
    %v182 = vld [vmem:[%s181] sm:$0x1]
    %s183 = sld [smem:[#allocation3 + $0x11]]
    %s184 = scalar_lea.vmem [#allocation4], %s183
    %v185 = vld [vmem:[%s184] sm:$0x1]
    %s186 = sld [smem:[#allocation3 + $0x12]]
    %s187 = scalar_lea.vmem [#allocation4], %s186
    %v188 = vld [vmem:[%s187] sm:$0x1]
    %s189 = sld [smem:[#allocation3 + $0x13]]
    %s190 = scalar_lea.vmem [#allocation4], %s189
    %v191 = vld [vmem:[%s190] sm:$0x1]
    %s192 = sld [smem:[#allocation3 + $0x14]]
    %s193 = scalar_lea.vmem [#allocation4], %s192
    %v194 = vld [vmem:[%s193] sm:$0x1]
    %s195 = sld [smem:[#allocation3 + $0x15]]
    %s196 = scalar_lea.vmem [#allocation4], %s195
    %v197 = vld [vmem:[%s196] sm:$0x1]
    %s198 = sld [smem:[#allocation3 + $0x16]]
    %s199 = scalar_lea.vmem [#allocation4], %s198
    %v200 = vld [vmem:[%s199] sm:$0x1]
    %s201 = sld [smem:[#allocation3 + $0x17]]
    %s202 = scalar_lea.vmem [#allocation4], %s201
    %v203 = vld [vmem:[%s202] sm:$0x1]
    %v205 = vperm.slane %v185, 0
    %v208 = vperm.slane %v188, 0
    %v211 = vperm.slane %v191, 0
    %v214 = vperm.slane %v194, 0
    %v217 = vperm.slane %v197, 0
    %v220 = vperm.slane %v200, 0
    %v223 = vperm.slane %v203, 0
    %v225 = vsel %vm112, %v182, %v205
    %v226 = vsel %vm114, %v225, %v208
    %v227 = vsel %vm116, %v226, %v211
    %v228 = vsel %vm118, %v227, %v214
    %v229 = vsel %vm120, %v228, %v217
    %v230 = vsel %vm122, %v229, %v220
    %v231 = vsel %vm124, %v230, %v223
    %232 = vst [vmem:[#allocation10 + $0x10] sm:$0xff] %v231
    %s233 = sld [smem:[#allocation3 + $0x18]]
    %s234 = scalar_lea.vmem [#allocation4], %s233
    %v235 = vld [vmem:[%s234] sm:$0x1]
    %s236 = sld [smem:[#allocation3 + $0x19]]
    %s237 = scalar_lea.vmem [#allocation4], %s236
    %v238 = vld [vmem:[%s237] sm:$0x1]
    %s239 = sld [smem:[#allocation3 + $0x1a]]
    %s240 = scalar_lea.vmem [#allocation4], %s239
    %v241 = vld [vmem:[%s240] sm:$0x1]
    %s242 = sld [smem:[#allocation3 + $0x1b]]
    %s243 = scalar_lea.vmem [#allocation4], %s242
    %v244 = vld [vmem:[%s243] sm:$0x1]
    %s245 = sld [smem:[#allocation3 + $0x1c]]
    %s246 = scalar_lea.vmem [#allocation4], %s245
    %v247 = vld [vmem:[%s246] sm:$0x1]
    %s248 = sld [smem:[#allocation3 + $0x1d]]
    %s249 = scalar_lea.vmem [#allocation4], %s248
    %v250 = vld [vmem:[%s249] sm:$0x1]
    %s251 = sld [smem:[#allocation3 + $0x1e]]
    %s252 = scalar_lea.vmem [#allocation4], %s251
    %v253 = vld [vmem:[%s252] sm:$0x1]
    %s254 = sld [smem:[#allocation3 + $0x1f]]
    %s255 = scalar_lea.vmem [#allocation4], %s254
    %v256 = vld [vmem:[%s255] sm:$0x1]
    %v258 = vperm.slane %v238, 0
    %v261 = vperm.slane %v241, 0
    %v264 = vperm.slane %v244, 0
    %v267 = vperm.slane %v247, 0
    %v270 = vperm.slane %v250, 0
    %v273 = vperm.slane %v253, 0
    %v276 = vperm.slane %v256, 0
    %v278 = vsel %vm112, %v235, %v258
    %v279 = vsel %vm114, %v278, %v261
    %v280 = vsel %vm116, %v279, %v264
    %v281 = vsel %vm118, %v280, %v267
    %v282 = vsel %vm120, %v281, %v270
    %v283 = vsel %vm122, %v282, %v273
    %v284 = vsel %vm124, %v283, %v276
    %285 = vst [vmem:[#allocation10 + $0x18] sm:$0xff] %v284
    %v286 = vld [vmem:[#allocation7] sm:$0xff]
    %v287 = vld [vmem:[#allocation9] sm:$0xff]
    %v288 = vmul.f32 %v286, %v287
    %289 = vst [vmem:[#allocation10 + $0x20] sm:$0xff] %v288
    // Predicated region
    $region26: #{tpu_custom_call.1} parent=1 // pred_check
      _
    $region27: #{tpu_custom_call.1} parent=1 // pred_check_branch
      %291 = sbr.rel (0) target = $region29
    $region28: #{tpu_custom_call.1} parent=1 // pred_region
      %293 = vsyncadd [#allocation6], 0
      %s294 = sshll.u32 [#allocation10], 4
      %s295 = int_to_ptr.vmem [resolvable:$true] %s294
      %s296 = sshll.u32 %s4, 4
      %s297 = int_to_ptr.hbm [resolvable:$true] %s296
      %302 = dma.vmem_to_hbm [thread:$0]  %s295, 640, %s297, [#allocation6], 128, 128, 8
    $region29: #{tpu_custom_call.1} parent=1 // pred_fallthru
      _
    // Predicated region
    $region30: #{tpu_custom_call.1} parent=1 // pred_check
      _
    $region31: #{tpu_custom_call.1} parent=1 // pred_check_branch
      %304 = sbr.rel (0) target = $region33
    $region32: #{tpu_custom_call.1} parent=1 // pred_region
      %306 = dma.done [#allocation6], 640
    $region33: #{tpu_custom_call.1} parent=1 // pred_fallthru
      _
    %307 = vsyncpa [#allocation5], 1
    %308 = vsyncpa [#allocation8], 1
    %309 = vsyncpa [#allocation6], 1

</llo_original>
